<compile_context>
chip_gen: v5e
topology: v5e:2x2
jax: 0.10.0
libtpu: 0.0.40
codegen_flags: <defaults>
</compile_context>

<pallas_src>
import jax
import jax.numpy as jnp
from jax.experimental import pallas as pl
from jax.experimental.pallas import tpu as pltpu


LN_EPS = 1e-5              # torch.nn.LayerNorm default eps
SOFTPLUS_THRESHOLD = 20.0  # torch.nn.Softplus default threshold (beta=1)
_LANE = 128
_SUBLANE = 8


def _round_up(x, m):
    return ((x + m - 1) // m) * m


def _make_decoder_kernel(num_linear):
    """Build a kernel for `num_linear` Linear layers.

    Ref order: z, (w0T, b0), (w1T, b1), ..., out.
    Weights are pre-transposed to (in, out) in the wrapper, so the kernel
    computes h @ Wt + b with no in-kernel transpose.
    All but the last Linear are followed by LayerNorm(elementwise_affine=False)
    + ReLU (matches the PyTorch module).  The last Linear is followed by
    softplus with PyTorch's threshold semantics.
    """

    def kernel(*refs):
        z_ref = refs[0]
        param_refs = refs[1:1 + 2 * num_linear]
        o_ref = refs[1 + 2 * num_linear]

        h = z_ref[...].astype(jnp.float32)

        # Hidden layers: Linear -> LayerNorm (no affine) -> ReLU
        for i in range(num_linear - 1):
            wt = param_refs[2 * i][...].astype(jnp.float32)       # (in, out)
            b = param_refs[2 * i + 1][...].astype(jnp.float32)    # (1, out)
            h = jnp.dot(h, wt, preferred_element_type=jnp.float32) + b
            # Independent reductions (E[x] and E[x^2]) so the two cross-lane
            # reductions are not serialized on each other.
            mean = jnp.mean(h, axis=-1, keepdims=True)
            mean_sq = jnp.mean(h * h, axis=-1, keepdims=True)
            var = jnp.maximum(mean_sq - mean * mean, 0.0)
            h = (h - mean) * jax.lax.rsqrt(var + LN_EPS)
            h = jnp.maximum(h, 0.0)

        # Final Linear -> Softplus (beta=1, threshold=20, torch semantics).
        wt = param_refs[2 * (num_linear - 1)][...].astype(jnp.float32)
        b = param_refs[2 * (num_linear - 1) + 1][...].astype(jnp.float32)
        ld = jnp.dot(h, wt, preferred_element_type=jnp.float32) + b
        sp = jnp.log1p(jnp.exp(jnp.minimum(ld, SOFTPLUS_THRESHOLD)))
        o_ref[...] = jnp.where(ld > SOFTPLUS_THRESHOLD, ld, sp).astype(o_ref.dtype)

    return kernel


def _choose_block_batch(batch, z_dim, h_dim, x_pad, param_bytes):
    """VMEM-budgeted batch tile: big enough to amortize the ~0.35us/step grid
    overhead and fill the MXU in M, small enough to fit the scoped VMEM limit
    with headroom (valid on v5e/v6e/v7x)."""
    vmem_budget = 24 * 1024 * 1024            # headroom under 32 MiB scoped limit
    avail = max(vmem_budget - param_bytes, 1 << 20)
    # Double-buffered in/out blocks plus a few f32 intermediates per row.
    per_row_bytes = 4 * (2 * z_dim + 2 * x_pad + 4 * h_dim)
    bb = avail // per_row_bytes
    bb = max(_SUBLANE, min(1024, (bb // _SUBLANE) * _SUBLANE))
    if batch >= 2 * _SUBLANE:
        # Keep at least 2 grid steps so v7x's 2 TensorCores can both work
        # (the batch axis is marked "parallel").
        bb = min(bb, _round_up(pl.cdiv(batch, 2), _SUBLANE))
    bb = min(bb, _round_up(batch, _SUBLANE))
    return int(bb)


def decoder_forward(z, params, *, block_batch=None):
    """Run the Decoder forward pass as a single Pallas kernel.

    z:       (B, z_dim) float32
    params:  list of (weight, bias) pairs, weight (out, in) [PyTorch layout],
             bias (out,)
    Returns: (B, x_dim) float32
    """
    B, z_dim = z.shape
    num_linear = len(params)
    h_dim = params[0][0].shape[0]
    x_dim = params[-1][0].shape[0]
    x_pad = _round_up(x_dim, _LANE)   # lane-dense output (unmasked vst)

    # Pre-transpose weights to (in, out); biases to (1, out).  The final layer
    # is zero-padded along the output dim so the store tile is lane-dense;
    # padded columns are sliced off below.
    flat_params = []
    for li, (w, b) in enumerate(params):
        wt = jnp.asarray(w, jnp.float32).T            # (in, out)
        bias = jnp.asarray(b, jnp.float32).reshape(1, -1)
        if li == num_linear - 1 and x_pad != x_dim:
            wt = jnp.pad(wt, ((0, 0), (0, x_pad - x_dim)))
            bias = jnp.pad(bias, ((0, 0), (0, x_pad - x_dim)))
        flat_params.append(wt)
        flat_params.append(bias)

    param_bytes = sum(int(p.size) * p.dtype.itemsize for p in flat_params)

    if block_batch is None:
        block_batch = _choose_block_batch(B, z_dim, h_dim, x_pad, param_bytes)
    block_batch = max(_SUBLANE, _round_up(int(block_batch), _SUBLANE))

    # Pad the batch so any block_batch works (no divisibility requirement).
    # Padded rows flow harmlessly through LN (+eps) and are sliced off.
    B_pad = _round_up(B, block_batch)
    z_p = jnp.asarray(z, jnp.float32)
    if B_pad != B:
        z_p = jnp.pad(z_p, ((0, B_pad - B), (0, 0)))

    kernel = _make_decoder_kernel(num_linear)

    in_specs = [pl.BlockSpec((block_batch, z_dim), lambda i: (i, 0))]
    for p in flat_params:
        # Whole weight/bias resident in VMEM, constant index_map ->
        # single-buffer it (nothing to pipeline; halves param VMEM).
        in_specs.append(
            pl.BlockSpec(p.shape, lambda i: (0, 0), pipeline_mode=pl.Buffered(1)))

    out_spec = pl.BlockSpec((block_batch, x_pad), lambda i: (i, 0))
    grid = (B_pad // block_batch,)

    fn = pl.pallas_call(
        kernel,
        out_shape=jax.ShapeDtypeStruct((B_pad, x_pad), jnp.float32),
        grid_spec=pltpu.PrefetchScalarGridSpec(
            num_scalar_prefetch=0,
            grid=grid,
            in_specs=in_specs,
            out_specs=out_spec,
        ),
        compiler_params=pltpu.CompilerParams(
            dimension_semantics=("parallel",),
            vmem_limit_bytes=32 * 1024 * 1024,
        ),
    )
    out = fn(z_p, *flat_params)
    return out[:B, :x_dim]


def init_decoder_params(key, num_h_layers, z_dim, h_dim, x_dim):
    """Deterministic init mimicking torch.nn.Linear default (uniform +/- 1/sqrt(fan_in))."""
    dims = [(z_dim, h_dim)] + [(h_dim, h_dim)] * (num_h_layers - 1) + [(h_dim, x_dim)]
    params = []
    for (fan_in, fan_out) in dims:
        key, kw, kb = jax.random.split(key, 3)
        bound = 1.0 / jnp.sqrt(fan_in)
        w = jax.random.uniform(kw, (fan_out, fan_in), jnp.float32, -bound, bound)
        b = jax.random.uniform(kb, (fan_out,), jnp.float32, -bound, bound)
        params.append((w, b))
    return params


def decoder_reference(z, params):
    """Pure-JAX reference for correctness checking (matches the torch module)."""
    h = z
    for (w, b) in params[:-1]:
        h = h @ w.T + b
        mean = jnp.mean(h, axis=-1, keepdims=True)
        var = jnp.mean((h - mean) ** 2, axis=-1, keepdims=True)
        h = (h - mean) * jax.lax.rsqrt(var + LN_EPS)
        h = jnp.maximum(h, 0.0)
    w, b = params[-1]
    ld = h @ w.T + b
    return jnp.where(ld > SOFTPLUS_THRESHOLD, ld,
                     jnp.log1p(jnp.exp(jnp.minimum(ld, SOFTPLUS_THRESHOLD))))


if __name__ == "__main__":
    # Small, decoder-consistent shapes.
    batch, num_h_layers, z_dim, h_dim, x_dim = 16, 3, 16, 32, 24

    key = jax.random.PRNGKey(0)
    key, kz = jax.random.split(key)
    z = jax.random.normal(kz, (batch, z_dim), dtype=jnp.float32)

    params = init_decoder_params(key, num_h_layers, z_dim, h_dim, x_dim)

    out = decoder_forward(z, params)         # auto-selected block_batch
    out = jax.block_until_ready(out)

    ref = decoder_reference(z, params)
    assert out.shape == (batch, x_dim)
    assert jnp.allclose(out, ref, atol=1e-4, rtol=1e-4), "mismatch vs reference"

    print("KERNEL_OK")
</pallas_src>

<mosaic_0001>
module attributes {stable_mosaic.version = 11 : i64} {
  func.func @kernel(%arg0: i32, %arg1: memref<8x16xf32, #tpu.memory_space<vmem>>, %arg2: memref<16x32xf32, #tpu.memory_space<vmem>>, %arg3: memref<1x32xf32, #tpu.memory_space<vmem>>, %arg4: memref<32x32xf32, #tpu.memory_space<vmem>>, %arg5: memref<1x32xf32, #tpu.memory_space<vmem>>, %arg6: memref<32x32xf32, #tpu.memory_space<vmem>>, %arg7: memref<1x32xf32, #tpu.memory_space<vmem>>, %arg8: memref<32x128xf32, #tpu.memory_space<vmem>>, %arg9: memref<1x128xf32, #tpu.memory_space<vmem>>, %arg10: memref<8x128xf32, #tpu.memory_space<vmem>>) attributes {dimension_semantics = [#tpu.dimension_semantics<parallel>], iteration_bounds = array<i64: 2>, scalar_prefetch = 0 : i64, scratch_operands = 0 : i64, tpu.core_type = #tpu.core_type<tc>, window_params = [{transform_indices = @transform_0, window_bounds = array<i64: 8, 16>}, {pipeline_mode = #tpu.pipeline_mode<synchronous>, transform_indices = @transform_1, window_bounds = array<i64: 16, 32>}, {pipeline_mode = #tpu.pipeline_mode<synchronous>, transform_indices = @transform_2, window_bounds = array<i64: 1, 32>}, {pipeline_mode = #tpu.pipeline_mode<synchronous>, transform_indices = @transform_3, window_bounds = array<i64: 32, 32>}, {pipeline_mode = #tpu.pipeline_mode<synchronous>, transform_indices = @transform_4, window_bounds = array<i64: 1, 32>}, {pipeline_mode = #tpu.pipeline_mode<synchronous>, transform_indices = @transform_5, window_bounds = array<i64: 32, 32>}, {pipeline_mode = #tpu.pipeline_mode<synchronous>, transform_indices = @transform_6, window_bounds = array<i64: 1, 32>}, {pipeline_mode = #tpu.pipeline_mode<synchronous>, transform_indices = @transform_7, window_bounds = array<i64: 32, 128>}, {pipeline_mode = #tpu.pipeline_mode<synchronous>, transform_indices = @transform_8, window_bounds = array<i64: 1, 128>}, {transform_indices = @transform_9, window_bounds = array<i64: 8, 128>}]} {
    %c0 = arith.constant 0 : index
    %c0_0 = arith.constant 0 : index
    %0 = vector.load %arg1[%c0, %c0_0] : memref<8x16xf32, #tpu.memory_space<vmem>>, vector<8x16xf32>
    %c0_1 = arith.constant 0 : index
    %c0_2 = arith.constant 0 : index
    %1 = vector.load %arg2[%c0_1, %c0_2] : memref<16x32xf32, #tpu.memory_space<vmem>>, vector<16x32xf32>
    %c0_3 = arith.constant 0 : index
    %c0_4 = arith.constant 0 : index
    %2 = vector.load %arg3[%c0_3, %c0_4] : memref<1x32xf32, #tpu.memory_space<vmem>>, vector<1x32xf32>
    %cst = arith.constant dense<0.000000e+00> : vector<8x32xf32>
    %3 = tpu.matmul %0, %1, %cst {dimension_numbers = #tpu.dot_dimension_numbers<[1], [0], [0], [1], [0, 0, 1, 1], [], []>} : vector<8x16xf32>, vector<16x32xf32>, vector<8x32xf32> -> vector<8x32xf32>
    %4 = vector.broadcast %2 : vector<1x32xf32> to vector<8x32xf32>
    %5 = arith.addf %3, %4 : vector<8x32xf32>
    %cst_5 = arith.constant dense<0.000000e+00> : vector<8xf32>
    %6 = vector.multi_reduction <add>, %5, %cst_5 [1] : vector<8x32xf32> to vector<8xf32>
    %7 = vector.shape_cast %6 : vector<8xf32> to vector<8x1xf32>
    %cst_6 = arith.constant 3.200000e+01 : f32
    %8 = vector.broadcast %cst_6 : f32 to vector<8x1xf32>
    %9 = arith.divf %7, %8 : vector<8x1xf32>
    %10 = arith.mulf %5, %5 : vector<8x32xf32>
    %cst_7 = arith.constant dense<0.000000e+00> : vector<8xf32>
    %11 = vector.multi_reduction <add>, %10, %cst_7 [1] : vector<8x32xf32> to vector<8xf32>
    %12 = vector.shape_cast %11 : vector<8xf32> to vector<8x1xf32>
    %cst_8 = arith.constant 3.200000e+01 : f32
    %13 = vector.broadcast %cst_8 : f32 to vector<8x1xf32>
    %14 = arith.divf %12, %13 : vector<8x1xf32>
    %15 = arith.mulf %9, %9 : vector<8x1xf32>
    %16 = arith.subf %14, %15 : vector<8x1xf32>
    %cst_9 = arith.constant 0.000000e+00 : f32
    %17 = vector.broadcast %cst_9 : f32 to vector<8x1xf32>
    %18 = arith.maximumf %16, %17 : vector<8x1xf32>
    %19 = vector.broadcast %9 : vector<8x1xf32> to vector<8x32xf32>
    %20 = arith.subf %5, %19 : vector<8x32xf32>
    %cst_10 = arith.constant 9.99999974E-6 : f32
    %21 = vector.broadcast %cst_10 : f32 to vector<8x1xf32>
    %22 = arith.addf %18, %21 : vector<8x1xf32>
    %23 = math.rsqrt %22 : vector<8x1xf32>
    %24 = vector.broadcast %23 : vector<8x1xf32> to vector<8x32xf32>
    %25 = arith.mulf %20, %24 : vector<8x32xf32>
    %cst_11 = arith.constant 0.000000e+00 : f32
    %26 = vector.broadcast %cst_11 : f32 to vector<8x32xf32>
    %27 = arith.maximumf %25, %26 : vector<8x32xf32>
    %c0_12 = arith.constant 0 : index
    %c0_13 = arith.constant 0 : index
    %28 = vector.load %arg4[%c0_12, %c0_13] : memref<32x32xf32, #tpu.memory_space<vmem>>, vector<32x32xf32>
    %c0_14 = arith.constant 0 : index
    %c0_15 = arith.constant 0 : index
    %29 = vector.load %arg5[%c0_14, %c0_15] : memref<1x32xf32, #tpu.memory_space<vmem>>, vector<1x32xf32>
    %cst_16 = arith.constant dense<0.000000e+00> : vector<8x32xf32>
    %30 = tpu.matmul %27, %28, %cst_16 {dimension_numbers = #tpu.dot_dimension_numbers<[1], [0], [0], [1], [0, 0, 1, 1], [], []>} : vector<8x32xf32>, vector<32x32xf32>, vector<8x32xf32> -> vector<8x32xf32>
    %31 = vector.broadcast %29 : vector<1x32xf32> to vector<8x32xf32>
    %32 = arith.addf %30, %31 : vector<8x32xf32>
    %cst_17 = arith.constant dense<0.000000e+00> : vector<8xf32>
    %33 = vector.multi_reduction <add>, %32, %cst_17 [1] : vector<8x32xf32> to vector<8xf32>
    %34 = vector.shape_cast %33 : vector<8xf32> to vector<8x1xf32>
    %cst_18 = arith.constant 3.200000e+01 : f32
    %35 = vector.broadcast %cst_18 : f32 to vector<8x1xf32>
    %36 = arith.divf %34, %35 : vector<8x1xf32>
    %37 = arith.mulf %32, %32 : vector<8x32xf32>
    %cst_19 = arith.constant dense<0.000000e+00> : vector<8xf32>
    %38 = vector.multi_reduction <add>, %37, %cst_19 [1] : vector<8x32xf32> to vector<8xf32>
    %39 = vector.shape_cast %38 : vector<8xf32> to vector<8x1xf32>
    %cst_20 = arith.constant 3.200000e+01 : f32
    %40 = vector.broadcast %cst_20 : f32 to vector<8x1xf32>
    %41 = arith.divf %39, %40 : vector<8x1xf32>
    %42 = arith.mulf %36, %36 : vector<8x1xf32>
    %43 = arith.subf %41, %42 : vector<8x1xf32>
    %cst_21 = arith.constant 0.000000e+00 : f32
    %44 = vector.broadcast %cst_21 : f32 to vector<8x1xf32>
    %45 = arith.maximumf %43, %44 : vector<8x1xf32>
    %46 = vector.broadcast %36 : vector<8x1xf32> to vector<8x32xf32>
    %47 = arith.subf %32, %46 : vector<8x32xf32>
    %cst_22 = arith.constant 9.99999974E-6 : f32
    %48 = vector.broadcast %cst_22 : f32 to vector<8x1xf32>
    %49 = arith.addf %45, %48 : vector<8x1xf32>
    %50 = math.rsqrt %49 : vector<8x1xf32>
    %51 = vector.broadcast %50 : vector<8x1xf32> to vector<8x32xf32>
    %52 = arith.mulf %47, %51 : vector<8x32xf32>
    %cst_23 = arith.constant 0.000000e+00 : f32
    %53 = vector.broadcast %cst_23 : f32 to vector<8x32xf32>
    %54 = arith.maximumf %52, %53 : vector<8x32xf32>
    %c0_24 = arith.constant 0 : index
    %c0_25 = arith.constant 0 : index
    %55 = vector.load %arg6[%c0_24, %c0_25] : memref<32x32xf32, #tpu.memory_space<vmem>>, vector<32x32xf32>
    %c0_26 = arith.constant 0 : index
    %c0_27 = arith.constant 0 : index
    %56 = vector.load %arg7[%c0_26, %c0_27] : memref<1x32xf32, #tpu.memory_space<vmem>>, vector<1x32xf32>
    %cst_28 = arith.constant dense<0.000000e+00> : vector<8x32xf32>
    %57 = tpu.matmul %54, %55, %cst_28 {dimension_numbers = #tpu.dot_dimension_numbers<[1], [0], [0], [1], [0, 0, 1, 1], [], []>} : vector<8x32xf32>, vector<32x32xf32>, vector<8x32xf32> -> vector<8x32xf32>
    %58 = vector.broadcast %56 : vector<1x32xf32> to vector<8x32xf32>
    %59 = arith.addf %57, %58 : vector<8x32xf32>
    %cst_29 = arith.constant dense<0.000000e+00> : vector<8xf32>
    %60 = vector.multi_reduction <add>, %59, %cst_29 [1] : vector<8x32xf32> to vector<8xf32>
    %61 = vector.shape_cast %60 : vector<8xf32> to vector<8x1xf32>
    %cst_30 = arith.constant 3.200000e+01 : f32
    %62 = vector.broadcast %cst_30 : f32 to vector<8x1xf32>
    %63 = arith.divf %61, %62 : vector<8x1xf32>
    %64 = arith.mulf %59, %59 : vector<8x32xf32>
    %cst_31 = arith.constant dense<0.000000e+00> : vector<8xf32>
    %65 = vector.multi_reduction <add>, %64, %cst_31 [1] : vector<8x32xf32> to vector<8xf32>
    %66 = vector.shape_cast %65 : vector<8xf32> to vector<8x1xf32>
    %cst_32 = arith.constant 3.200000e+01 : f32
    %67 = vector.broadcast %cst_32 : f32 to vector<8x1xf32>
    %68 = arith.divf %66, %67 : vector<8x1xf32>
    %69 = arith.mulf %63, %63 : vector<8x1xf32>
    %70 = arith.subf %68, %69 : vector<8x1xf32>
    %cst_33 = arith.constant 0.000000e+00 : f32
    %71 = vector.broadcast %cst_33 : f32 to vector<8x1xf32>
    %72 = arith.maximumf %70, %71 : vector<8x1xf32>
    %73 = vector.broadcast %63 : vector<8x1xf32> to vector<8x32xf32>
    %74 = arith.subf %59, %73 : vector<8x32xf32>
    %cst_34 = arith.constant 9.99999974E-6 : f32
    %75 = vector.broadcast %cst_34 : f32 to vector<8x1xf32>
    %76 = arith.addf %72, %75 : vector<8x1xf32>
    %77 = math.rsqrt %76 : vector<8x1xf32>
    %78 = vector.broadcast %77 : vector<8x1xf32> to vector<8x32xf32>
    %79 = arith.mulf %74, %78 : vector<8x32xf32>
    %cst_35 = arith.constant 0.000000e+00 : f32
    %80 = vector.broadcast %cst_35 : f32 to vector<8x32xf32>
    %81 = arith.maximumf %79, %80 : vector<8x32xf32>
    %c0_36 = arith.constant 0 : index
    %c0_37 = arith.constant 0 : index
    %82 = vector.load %arg8[%c0_36, %c0_37] : memref<32x128xf32, #tpu.memory_space<vmem>>, vector<32x128xf32>
    %c0_38 = arith.constant 0 : index
    %c0_39 = arith.constant 0 : index
    %83 = vector.load %arg9[%c0_38, %c0_39] : memref<1x128xf32, #tpu.memory_space<vmem>>, vector<1x128xf32>
    %cst_40 = arith.constant dense<0.000000e+00> : vector<8x128xf32>
    %84 = tpu.matmul %81, %82, %cst_40 {dimension_numbers = #tpu.dot_dimension_numbers<[1], [0], [0], [1], [0, 0, 1, 1], [], []>} : vector<8x32xf32>, vector<32x128xf32>, vector<8x128xf32> -> vector<8x128xf32>
    %85 = vector.broadcast %83 : vector<1x128xf32> to vector<8x128xf32>
    %86 = arith.addf %84, %85 : vector<8x128xf32>
    %cst_41 = arith.constant 2.000000e+01 : f32
    %87 = vector.broadcast %cst_41 : f32 to vector<8x128xf32>
    %88 = arith.minimumf %86, %87 : vector<8x128xf32>
    %89 = math.exp %88 : vector<8x128xf32>
    %90 = math.log1p %89 : vector<8x128xf32>
    %cst_42 = arith.constant 2.000000e+01 : f32
    %91 = vector.broadcast %cst_42 : f32 to vector<8x128xf32>
    %92 = arith.cmpf ogt, %86, %91 : vector<8x128xf32>
    %93 = arith.select %92, %86, %90 : vector<8x128xi1>, vector<8x128xf32>
    %c0_43 = arith.constant 0 : index
    %c0_44 = arith.constant 0 : index
    %94 = vector.load %arg10[%c0_43, %c0_44] : memref<8x128xf32, #tpu.memory_space<vmem>>, vector<8x128xf32>
    tpu.vector_store %arg10[%c0_43, %c0_44], %93 {strides = array<i32>} : memref<8x128xf32, #tpu.memory_space<vmem>>, vector<8x128xf32>,
    return
  }
  func.func @transform_0(%arg0: i32) -> (i32, i32) {
    %c0_i32 = arith.constant 0 : i32
    %c0_i32_0 = arith.constant 0 : i32
    return %arg0, %c0_i32 : i32, i32
  }
  func.func @transform_1(%arg0: i32) -> (i32, i32) {
    %c0_i32 = arith.constant 0 : i32
    %c0_i32_0 = arith.constant 0 : i32
    %c0_i32_1 = arith.constant 0 : i32
    return %c0_i32, %c0_i32_0 : i32, i32
  }
  func.func @transform_2(%arg0: i32) -> (i32, i32) {
    %c0_i32 = arith.constant 0 : i32
    %c0_i32_0 = arith.constant 0 : i32
    %c0_i32_1 = arith.constant 0 : i32
    return %c0_i32, %c0_i32_0 : i32, i32
  }
  func.func @transform_3(%arg0: i32) -> (i32, i32) {
    %c0_i32 = arith.constant 0 : i32
    %c0_i32_0 = arith.constant 0 : i32
    %c0_i32_1 = arith.constant 0 : i32
    return %c0_i32, %c0_i32_0 : i32, i32
  }
  func.func @transform_4(%arg0: i32) -> (i32, i32) {
    %c0_i32 = arith.constant 0 : i32
    %c0_i32_0 = arith.constant 0 : i32
    %c0_i32_1 = arith.constant 0 : i32
    return %c0_i32, %c0_i32_0 : i32, i32
  }
  func.func @transform_5(%arg0: i32) -> (i32, i32) {
    %c0_i32 = arith.constant 0 : i32
    %c0_i32_0 = arith.constant 0 : i32
    %c0_i32_1 = arith.constant 0 : i32
    return %c0_i32, %c0_i32_0 : i32, i32
  }
  func.func @transform_6(%arg0: i32) -> (i32, i32) {
    %c0_i32 = arith.constant 0 : i32
    %c0_i32_0 = arith.constant 0 : i32
    %c0_i32_1 = arith.constant 0 : i32
    return %c0_i32, %c0_i32_0 : i32, i32
  }
  func.func @transform_7(%arg0: i32) -> (i32, i32) {
    %c0_i32 = arith.constant 0 : i32
    %c0_i32_0 = arith.constant 0 : i32
    %c0_i32_1 = arith.constant 0 : i32
    return %c0_i32, %c0_i32_0 : i32, i32
  }
  func.func @transform_8(%arg0: i32) -> (i32, i32) {
    %c0_i32 = arith.constant 0 : i32
    %c0_i32_0 = arith.constant 0 : i32
    %c0_i32_1 = arith.constant 0 : i32
    return %c0_i32, %c0_i32_0 : i32, i32
  }
  func.func @transform_9(%arg0: i32) -> (i32, i32) {
    %c0_i32 = arith.constant 0 : i32
    %c0_i32_0 = arith.constant 0 : i32
    return %arg0, %c0_i32 : i32, i32
  }
}

</mosaic_0001>

<llo_original>
// kernel: tpu_custom_call.1
$region0: #{tpu_custom_call.1}
  #allocation0 [shape = 'u32[]', space=smem, size = 0x4, offset = 0x4, fixed_abs, tag = 'smem constant byte address 0x4 - core index']
  #allocation1 [shape = 'u32[72,128]{1,0:T(1,128)}', space=vmem, size = 0x9000, scoped, tag = 'internal scratch']
  %s0 = inlined_call_operand.hbm [shape: f32[16,16], index: 0, kind: input, shape index: {}]
  %s1 = inlined_call_operand.hbm [shape: f32[16,32], index: 1, kind: input, shape index: {}]
  %s2 = inlined_call_operand.vmem [shape: f32[1,32], index: 2, kind: input, shape index: {}]
  %s3 = inlined_call_operand.hbm [shape: f32[32,32], index: 3, kind: input, shape index: {}]
  %s4 = inlined_call_operand.vmem [shape: f32[1,32], index: 4, kind: input, shape index: {}]
  %s5 = inlined_call_operand.hbm [shape: f32[32,32], index: 5, kind: input, shape index: {}]
  %s6 = inlined_call_operand.vmem [shape: f32[1,32], index: 6, kind: input, shape index: {}]
  %s7 = inlined_call_operand.hbm [shape: f32[32,128], index: 7, kind: input, shape index: {}]
  %s8 = inlined_call_operand.vmem [shape: f32[1,128], index: 8, kind: input, shape index: {}]
  %s9 = inlined_call_operand.hbm [shape: f32[16,128], index: 9, kind: output, shape index: {}]
  %s10 = sld [smem:[#allocation0]]
  $region89: #{tpu_custom_call.1} parent=0
    _
  %s12 = ssub.s32 1, %s10
  %s13 = scalar_select 0, %s12, %s10
  $region1: #{tpu_custom_call.1} parent=0
    #allocation2 [shape = 'u8[8192]{0}', space=vmem, size = 0x2000, scoped, tag = 'input window, operand 0']
    #allocation3 [shape = 's32[2]{0}', space=sflag, size = 0x8, scoped, tag = 'scoped memory for tpu_custom_call.1']
    #allocation4 [shape = 's32[2]{0}', space=sflag, size = 0x8, scoped, tag = 'scoped memory for tpu_custom_call.1']
    #allocation5 [shape = 'u8[8192]{0}', space=vmem, size = 0x2000, scoped, tag = 'input window, operand 1, single buffered']
    #allocation6 [shape = 's32[1]{0}', space=sflag, size = 0x4, scoped, tag = 'scoped memory for tpu_custom_call.1']
    #allocation7 [shape = 'u8[16384]{0}', space=vmem, size = 0x4000, scoped, tag = 'input window, operand 3, single buffered']
    #allocation8 [shape = 'u8[16384]{0}', space=vmem, size = 0x4000, scoped, tag = 'input window, operand 5, single buffered']
    #allocation9 [shape = 's32[1]{0}', space=sflag, size = 0x4, scoped, tag = 'scoped memory for tpu_custom_call.1']
    #allocation10 [shape = 'u8[16384]{0}', space=vmem, size = 0x4000, scoped, tag = 'input window, operand 7, single buffered']
    #allocation11 [shape = 'u8[8192]{0}', space=vmem, size = 0x2000, scoped, tag = 'output window, operand 0']
    %14 = vsyncpa [#allocation3], 0
    %s15 = scalar_lea.sflag [#allocation3], 1
    %16 = vsyncpa %s15, 0
    %17 = vsyncpa [#allocation6], 0
    %18 = vsyncpa [#allocation9], 0
    %19 = vsyncpa [#allocation4], 0
    %s20 = scalar_lea.sflag [#allocation4], 1
    %21 = vsyncpa %s20, 0
    loop: start=0, step=1, limit=4
    $region2: #{tpu_custom_call.1} parent=1 // loop_pre_header
      _
    $region3: #{tpu_custom_call.1} parent=1 // loop_header
      %s23 = sphi 0, %s27
      %p24 = scmp.ge.s32.totalorder %s23, 4
      %s33 = sphi 0, %s35
      %s36 = sphi 0, %s33
      %s37 = sphi 0, %s36
      %s53 = sphi 0, %s37
      %s57 = sphi 0, %s57
      %s59 = sphi 0, %s57
      %s60 = sphi 0, %s59
      %s74 = sphi 0, %s60
      %s78 = sphi 0, %s78
      %s80 = sphi 0, %s78
      %s81 = sphi 0, %s80
      %s95 = sphi 0, %s81
      %s99 = sphi 0, %s99
      %s101 = sphi 0, %s99
      %s102 = sphi 0, %s101
      %s116 = sphi 0, %s102
      %s120 = sphi 0, %s120
      %s122 = sphi 0, %s120
      %s123 = sphi 0, %s122
      %s137 = sphi 0, %s123
      %s141 = sphi 0, %s141
      %s143 = sphi 0, %s141
      %s144 = sphi 0, %s143
      %s158 = sphi 0, %s144
      %s162 = sphi 0, %s162
      %s164 = sphi 0, %s162
      %s165 = sphi 0, %s164
      %s179 = sphi 0, %s165
      %s183 = sphi 0, %s183
      %s185 = sphi 0, %s183
      %s186 = sphi 0, %s185
      %s200 = sphi 0, %s186
      %s204 = sphi 0, %s204
      %s206 = sphi 0, %s204
      %s207 = sphi 0, %s206
      %s221 = sphi 0, %s207
      %s227 = sphi 0, %s229
      %s230 = sphi 0, %s227
      %s231 = sphi 0, %s230
      %s247 = sphi 0, %s231
    $region4: #{tpu_custom_call.1} parent=1 // loop_header_branch
      %26 = sbr.rel (%p24) target = $region8
    $region5: #{tpu_custom_call.1} parent=1 // loop_body
      %s28 = ssub.s32 %s23, 1
      %s29 = ssub.s32 %s23, 2
      %s30 = sadd.s32 %s23, 1
      %s31 = ssub.s32 %s23, %s30
      %p32 = scmp.eq.s32.totalorder %s31, 0
      %s34 = sadd.s32 %s33, 1
      %s35 = scalar_select %p32, %s33, %s34
      %p38 = pneg %p32
      %p39 = scmp.eq.s32.totalorder %s23, 1
      %p40 = por %p38, %p39
      %p41 = scmp.ne.s32.totalorder %s33, %s36
      %p42 = scmp.eq.s32.totalorder %s23, 0
      %p43 = por %p41, %p42
      %p44 = scmp.ne.s32.totalorder %s33, %s36
      %p45 = scmp.eq.s32.totalorder %s28, 1
      %p46 = por %p44, %p45
      %p47 = scmp.ne.s32.totalorder %s36, %s37
      %p48 = scmp.eq.s32.totalorder %s28, 0
      %p49 = por %p47, %p48
      %p50 = scmp.ne.s32.totalorder %s36, %s37
      %p51 = scmp.eq.s32.totalorder %s29, 1
      %p52 = por %p50, %p51
      %p54 = scmp.ne.s32.totalorder %s37, %s53
      %p55 = scmp.eq.s32.totalorder %s29, 0
      %p56 = por %p54, %p55
      %s58 = sadd.s32 %s57, 1
      %p61 = scmp.eq.s32.totalorder %s23, 1
      %p62 = scmp.ne.s32.totalorder %s57, %s59
      %p63 = scmp.eq.s32.totalorder %s23, 0
      %p64 = por %p62, %p63
      %p65 = scmp.ne.s32.totalorder %s57, %s59
      %p66 = scmp.eq.s32.totalorder %s28, 1
      %p67 = por %p65, %p66
      %p68 = scmp.ne.s32.totalorder %s59, %s60
      %p69 = scmp.eq.s32.totalorder %s28, 0
      %p70 = por %p68, %p69
      %p71 = scmp.ne.s32.totalorder %s59, %s60
      %p72 = scmp.eq.s32.totalorder %s29, 1
      %p73 = por %p71, %p72
      %p75 = scmp.ne.s32.totalorder %s60, %s74
      %p76 = scmp.eq.s32.totalorder %s29, 0
      %p77 = por %p75, %p76
      %s79 = sadd.s32 %s78, 1
      %p82 = scmp.eq.s32.totalorder %s23, 1
      %p83 = scmp.ne.s32.totalorder %s78, %s80
      %p84 = scmp.eq.s32.totalorder %s23, 0
      %p85 = por %p83, %p84
      %p86 = scmp.ne.s32.totalorder %s78, %s80
      %p87 = scmp.eq.s32.totalorder %s28, 1
      %p88 = por %p86, %p87
      %p89 = scmp.ne.s32.totalorder %s80, %s81
      %p90 = scmp.eq.s32.totalorder %s28, 0
      %p91 = por %p89, %p90
      %p92 = scmp.ne.s32.totalorder %s80, %s81
      %p93 = scmp.eq.s32.totalorder %s29, 1
      %p94 = por %p92, %p93
      %p96 = scmp.ne.s32.totalorder %s81, %s95
      %p97 = scmp.eq.s32.totalorder %s29, 0
      %p98 = por %p96, %p97
      %s100 = sadd.s32 %s99, 1
      %p103 = scmp.eq.s32.totalorder %s23, 1
      %p104 = scmp.ne.s32.totalorder %s99, %s101
      %p105 = scmp.eq.s32.totalorder %s23, 0
      %p106 = por %p104, %p105
      %p107 = scmp.ne.s32.totalorder %s99, %s101
      %p108 = scmp.eq.s32.totalorder %s28, 1
      %p109 = por %p107, %p108
      %p110 = scmp.ne.s32.totalorder %s101, %s102
      %p111 = scmp.eq.s32.totalorder %s28, 0
      %p112 = por %p110, %p111
      %p113 = scmp.ne.s32.totalorder %s101, %s102
      %p114 = scmp.eq.s32.totalorder %s29, 1
      %p115 = por %p113, %p114
      %p117 = scmp.ne.s32.totalorder %s102, %s116
      %p118 = scmp.eq.s32.totalorder %s29, 0
      %p119 = por %p117, %p118
      %s121 = sadd.s32 %s120, 1
      %p124 = scmp.eq.s32.totalorder %s23, 1
      %p125 = scmp.ne.s32.totalorder %s120, %s122
      %p126 = scmp.eq.s32.totalorder %s23, 0
      %p127 = por %p125, %p126
      %p128 = scmp.ne.s32.totalorder %s120, %s122
      %p129 = scmp.eq.s32.totalorder %s28, 1
      %p130 = por %p128, %p129
      %p131 = scmp.ne.s32.totalorder %s122, %s123
      %p132 = scmp.eq.s32.totalorder %s28, 0
      %p133 = por %p131, %p132
      %p134 = scmp.ne.s32.totalorder %s122, %s123
      %p135 = scmp.eq.s32.totalorder %s29, 1
      %p136 = por %p134, %p135
      %p138 = scmp.ne.s32.totalorder %s123, %s137
      %p139 = scmp.eq.s32.totalorder %s29, 0
      %p140 = por %p138, %p139
      %s142 = sadd.s32 %s141, 1
      %p145 = scmp.eq.s32.totalorder %s23, 1
      %p146 = scmp.ne.s32.totalorder %s141, %s143
      %p147 = scmp.eq.s32.totalorder %s23, 0
      %p148 = por %p146, %p147
      %p149 = scmp.ne.s32.totalorder %s141, %s143
      %p150 = scmp.eq.s32.totalorder %s28, 1
      %p151 = por %p149, %p150
      %p152 = scmp.ne.s32.totalorder %s143, %s144
      %p153 = scmp.eq.s32.totalorder %s28, 0
      %p154 = por %p152, %p153
      %p155 = scmp.ne.s32.totalorder %s143, %s144
      %p156 = scmp.eq.s32.totalorder %s29, 1
      %p157 = por %p155, %p156
      %p159 = scmp.ne.s32.totalorder %s144, %s158
      %p160 = scmp.eq.s32.totalorder %s29, 0
      %p161 = por %p159, %p160
      %s163 = sadd.s32 %s162, 1
      %p166 = scmp.eq.s32.totalorder %s23, 1
      %p167 = scmp.ne.s32.totalorder %s162, %s164
      %p168 = scmp.eq.s32.totalorder %s23, 0
      %p169 = por %p167, %p168
      %p170 = scmp.ne.s32.totalorder %s162, %s164
      %p171 = scmp.eq.s32.totalorder %s28, 1
      %p172 = por %p170, %p171
      %p173 = scmp.ne.s32.totalorder %s164, %s165
      %p174 = scmp.eq.s32.totalorder %s28, 0
      %p175 = por %p173, %p174
      %p176 = scmp.ne.s32.totalorder %s164, %s165
      %p177 = scmp.eq.s32.totalorder %s29, 1
      %p178 = por %p176, %p177
      %p180 = scmp.ne.s32.totalorder %s165, %s179
      %p181 = scmp.eq.s32.totalorder %s29, 0
      %p182 = por %p180, %p181
      %s184 = sadd.s32 %s183, 1
      %p187 = scmp.eq.s32.totalorder %s23, 1
      %p188 = scmp.ne.s32.totalorder %s183, %s185
      %p189 = scmp.eq.s32.totalorder %s23, 0
      %p190 = por %p188, %p189
      %p191 = scmp.ne.s32.totalorder %s183, %s185
      %p192 = scmp.eq.s32.totalorder %s28, 1
      %p193 = por %p191, %p192
      %p194 = scmp.ne.s32.totalorder %s185, %s186
      %p195 = scmp.eq.s32.totalorder %s28, 0
      %p196 = por %p194, %p195
      %p197 = scmp.ne.s32.totalorder %s185, %s186
      %p198 = scmp.eq.s32.totalorder %s29, 1
      %p199 = por %p197, %p198
      %p201 = scmp.ne.s32.totalorder %s186, %s200
      %p202 = scmp.eq.s32.totalorder %s29, 0
      %p203 = por %p201, %p202
      %s205 = sadd.s32 %s204, 1
      %p208 = scmp.eq.s32.totalorder %s23, 1
      %p209 = scmp.ne.s32.totalorder %s204, %s206
      %p210 = scmp.eq.s32.totalorder %s23, 0
      %p211 = por %p209, %p210
      %p212 = scmp.ne.s32.totalorder %s204, %s206
      %p213 = scmp.eq.s32.totalorder %s28, 1
      %p214 = por %p212, %p213
      %p215 = scmp.ne.s32.totalorder %s206, %s207
      %p216 = scmp.eq.s32.totalorder %s28, 0
      %p217 = por %p215, %p216
      %p218 = scmp.ne.s32.totalorder %s206, %s207
      %p219 = scmp.eq.s32.totalorder %s29, 1
      %p220 = por %p218, %p219
      %p222 = scmp.ne.s32.totalorder %s207, %s221
      %p223 = scmp.eq.s32.totalorder %s29, 0
      %p224 = por %p222, %p223
      %s225 = ssub.s32 %s23, %s30
      %p226 = scmp.eq.s32.totalorder %s225, 0
      %s228 = sadd.s32 %s227, 1
      %s229 = scalar_select %p226, %s227, %s228
      %p232 = pneg %p226
      %p233 = scmp.eq.s32.totalorder %s23, 1
      %p234 = por %p232, %p233
      %p235 = scmp.ne.s32.totalorder %s227, %s230
      %p236 = scmp.eq.s32.totalorder %s23, 0
      %p237 = por %p235, %p236
      %p238 = scmp.ne.s32.totalorder %s227, %s230
      %p239 = scmp.eq.s32.totalorder %s28, 1
      %p240 = por %p238, %p239
      %p241 = scmp.ne.s32.totalorder %s230, %s231
      %p242 = scmp.eq.s32.totalorder %s28, 0
      %p243 = por %p241, %p242
      %p244 = scmp.ne.s32.totalorder %s230, %s231
      %p245 = scmp.eq.s32.totalorder %s29, 1
      %p246 = por %p244, %p245
      %p248 = scmp.ne.s32.totalorder %s231, %s247
      %p249 = scmp.eq.s32.totalorder %s29, 0
      %p250 = por %p248, %p249
      %p251 = scmp.le.s32.totalorder 1, %s23
      %p252 = scmp.lt.s32.totalorder %s23, 3
      %p253 = pnand %p251, %p252
      %p254 = pneg %p253
      // Predicated region
      $region9: #{tpu_custom_call.1} parent=5 // pred_check
        _
      $region10: #{tpu_custom_call.1} parent=5 // pred_check_branch
        %256 = sbr.rel (%p253) target = $region12
      $region11: #{tpu_custom_call.1} parent=5 // pred_region
        %s257 = ssub.s32 %s23, 1
        // Predicated region
        $region13: #{tpu_custom_call.1} parent=11 // pred_check
          %p258 = pneg %p70
        $region14: #{tpu_custom_call.1} parent=11 // pred_check_branch
          %260 = sbr.rel (%p258) target = $region16
        $region15: #{tpu_custom_call.1} parent=11 // pred_region
          %262 = vsyncadd [#allocation6], 0
          %s263 = sshll.u32 %s1, 4
          %s264 = int_to_ptr.hbm [resolvable:$true] %s263
          %s265 = sshll.u32 [#allocation5], 4
          %s266 = int_to_ptr.vmem [resolvable:$true] %s265
          %271 = dma.hbm_to_vmem [thread:$0]  %s264, 256, %s266, [#allocation6], 128, 128, 8
        $region16: #{tpu_custom_call.1} parent=11 // pred_fallthru
          _
        // Predicated region
        $region17: #{tpu_custom_call.1} parent=11 // pred_check
          %p272 = pneg %p91
        $region18: #{tpu_custom_call.1} parent=11 // pred_check_branch
          %274 = sbr.rel (%p272) target = $region20
        $region19: #{tpu_custom_call.1} parent=11 // pred_region
          _
        $region20: #{tpu_custom_call.1} parent=11 // pred_fallthru
          _
        // Predicated region
        $region21: #{tpu_custom_call.1} parent=11 // pred_check
          %p275 = pneg %p112
        $region22: #{tpu_custom_call.1} parent=11 // pred_check_branch
          %277 = sbr.rel (%p275) target = $region24
        $region23: #{tpu_custom_call.1} parent=11 // pred_region
          %279 = vsyncadd [#allocation6], 0
          %s280 = sshll.u32 %s3, 4
          %s281 = int_to_ptr.hbm [resolvable:$true] %s280
          %s282 = sshll.u32 [#allocation7], 4
          %s283 = int_to_ptr.vmem [resolvable:$true] %s282
          %288 = dma.hbm_to_vmem [thread:$0]  %s281, 512, %s283, [#allocation6], 128, 128, 8
        $region24: #{tpu_custom_call.1} parent=11 // pred_fallthru
          _
        // Predicated region
        $region25: #{tpu_custom_call.1} parent=11 // pred_check
          %p289 = pneg %p133
        $region26: #{tpu_custom_call.1} parent=11 // pred_check_branch
          %291 = sbr.rel (%p289) target = $region28
        $region27: #{tpu_custom_call.1} parent=11 // pred_region
          _
        $region28: #{tpu_custom_call.1} parent=11 // pred_fallthru
          _
        // Predicated region
        $region29: #{tpu_custom_call.1} parent=11 // pred_check
          %p292 = pneg %p154
        $region30: #{tpu_custom_call.1} parent=11 // pred_check_branch
          %294 = sbr.rel (%p292) target = $region32
        $region31: #{tpu_custom_call.1} parent=11 // pred_region
          %296 = vsyncadd [#allocation9], 0
          %s297 = sshll.u32 %s5, 4
          %s298 = int_to_ptr.hbm [resolvable:$true] %s297
          %s299 = sshll.u32 [#allocation8], 4
          %s300 = int_to_ptr.vmem [resolvable:$true] %s299
          %305 = dma.hbm_to_vmem [thread:$0]  %s298, 512, %s300, [#allocation9], 128, 128, 8
        $region32: #{tpu_custom_call.1} parent=11 // pred_fallthru
          _
        // Predicated region
        $region33: #{tpu_custom_call.1} parent=11 // pred_check
          %p306 = pneg %p175
        $region34: #{tpu_custom_call.1} parent=11 // pred_check_branch
          %308 = sbr.rel (%p306) target = $region36
        $region35: #{tpu_custom_call.1} parent=11 // pred_region
          _
        $region36: #{tpu_custom_call.1} parent=11 // pred_fallthru
          _
        // Predicated region
        $region37: #{tpu_custom_call.1} parent=11 // pred_check
          %p309 = pneg %p196
        $region38: #{tpu_custom_call.1} parent=11 // pred_check_branch
          %311 = sbr.rel (%p309) target = $region40
        $region39: #{tpu_custom_call.1} parent=11 // pred_region
          %313 = vsyncadd [#allocation9], 0
          %s314 = sshll.u32 %s7, 4
          %s315 = int_to_ptr.hbm [resolvable:$true] %s314
          %s316 = sshll.u32 [#allocation10], 4
          %s317 = int_to_ptr.vmem [resolvable:$true] %s316
          %322 = dma.hbm_to_vmem [thread:$0]  %s315, 512, %s317, [#allocation9], 128, 128, 8
        $region40: #{tpu_custom_call.1} parent=11 // pred_fallthru
          _
        // Predicated region
        $region41: #{tpu_custom_call.1} parent=11 // pred_check
          %p323 = pneg %p217
        $region42: #{tpu_custom_call.1} parent=11 // pred_check_branch
          %325 = sbr.rel (%p323) target = $region44
        $region43: #{tpu_custom_call.1} parent=11 // pred_region
          _
        $region44: #{tpu_custom_call.1} parent=11 // pred_fallthru
          _
      $region12: #{tpu_custom_call.1} parent=5 // pred_fallthru
        _
      %p326 = scmp.lt.s32.totalorder %s23, 2
      // Predicated region
      $region45: #{tpu_custom_call.1} parent=5 // pred_check
        %p327 = pneg %p326
      $region46: #{tpu_custom_call.1} parent=5 // pred_check_branch
        %329 = sbr.rel (%p327) target = $region48
      $region47: #{tpu_custom_call.1} parent=5 // pred_region
        // Predicated region
        $region49: #{tpu_custom_call.1} parent=47 // pred_check
          %p330 = pneg %p43
        $region50: #{tpu_custom_call.1} parent=47 // pred_check_branch
          %332 = sbr.rel (%p330) target = $region52
        $region51: #{tpu_custom_call.1} parent=47 // pred_region
          %s333 = sand.u32 %s33, 1
          %s334 = scalar_lea.sflag [#allocation3], %s333
          %s335 = sand.u32 %s33, 1
          %s336 = smul.addr %s335, 8
          %s337 = scalar_lea.vmem [#allocation2], %s336
          %339 = vsyncadd %s334, 0
          %s340 = smul.addr %s23, 8
          %s341 = scalar_lea.hbm %s0, %s340
          %s343 = sshll.u32 %s341, 4
          %s344 = int_to_ptr.hbm [resolvable:$true] %s343
          %s345 = sshll.u32 %s337, 4
          %s346 = int_to_ptr.vmem [resolvable:$true] %s345
          %348 = dma.hbm_to_vmem [thread:$0]  %s344, 128, %s346, %s334
        $region52: #{tpu_custom_call.1} parent=47 // pred_fallthru
          _
      $region48: #{tpu_custom_call.1} parent=5 // pred_fallthru
        _
      %p349 = scmp.le.s32.totalorder 1, %s23
      %p350 = scmp.lt.s32.totalorder %s23, 3
      %p351 = pnand %p349, %p350
      %p352 = pneg %p351
      // Predicated region
      $region53: #{tpu_custom_call.1} parent=5 // pred_check
        _
      $region54: #{tpu_custom_call.1} parent=5 // pred_check_branch
        %354 = sbr.rel (%p351) target = $region56
      $region55: #{tpu_custom_call.1} parent=5 // pred_region
        %s355 = ssub.s32 %s23, 1
        %s356 = sand.u32 %s36, 1
        %s357 = scalar_lea.sflag [#allocation3], %s356
        %s358 = sand.u32 %s36, 1
        %s359 = smul.addr %s358, 8
        %s360 = scalar_lea.vmem [#allocation2], %s359
        // Predicated region
        $region57: #{tpu_custom_call.1} parent=55 // pred_check
          %p361 = pneg %p49
        $region58: #{tpu_custom_call.1} parent=55 // pred_check_branch
          %363 = sbr.rel (%p361) target = $region60
        $region59: #{tpu_custom_call.1} parent=55 // pred_region
          %365 = dma.done %s357, 128
        $region60: #{tpu_custom_call.1} parent=55 // pred_fallthru
          _
        // Predicated region
        $region61: #{tpu_custom_call.1} parent=55 // pred_check
          %p366 = pneg %p70
        $region62: #{tpu_custom_call.1} parent=55 // pred_check_branch
          %368 = sbr.rel (%p366) target = $region64
        $region63: #{tpu_custom_call.1} parent=55 // pred_region
          %370 = dma.done [#allocation6], 256
        $region64: #{tpu_custom_call.1} parent=55 // pred_fallthru
          _
        // Predicated region
        $region65: #{tpu_custom_call.1} parent=55 // pred_check
          %p371 = pneg %p112
        $region66: #{tpu_custom_call.1} parent=55 // pred_check_branch
          %373 = sbr.rel (%p371) target = $region68
        $region67: #{tpu_custom_call.1} parent=55 // pred_region
          %375 = dma.done [#allocation6], 512
        $region68: #{tpu_custom_call.1} parent=55 // pred_fallthru
          _
        // Predicated region
        $region69: #{tpu_custom_call.1} parent=55 // pred_check
          %p376 = pneg %p154
        $region70: #{tpu_custom_call.1} parent=55 // pred_check_branch
          %378 = sbr.rel (%p376) target = $region72
        $region71: #{tpu_custom_call.1} parent=55 // pred_region
          %380 = dma.done [#allocation9], 512
        $region72: #{tpu_custom_call.1} parent=55 // pred_fallthru
          _
        // Predicated region
        $region73: #{tpu_custom_call.1} parent=55 // pred_check
          %p381 = pneg %p196
        $region74: #{tpu_custom_call.1} parent=55 // pred_check_branch
          %383 = sbr.rel (%p381) target = $region76
        $region75: #{tpu_custom_call.1} parent=55 // pred_region
          %385 = dma.done [#allocation9], 512
        $region76: #{tpu_custom_call.1} parent=55 // pred_fallthru
          _
        %s386 = sand.u32 %s36, 1
        %s387 = scalar_lea.sflag [#allocation3], %s386
        %s388 = sand.u32 %s36, 1
        %s389 = smul.addr %s388, 8
        %s390 = scalar_lea.vmem [#allocation2], %s389
        %p391 = pneg %p49
        %p392 = pneg %p46
        %p393 = pneg %p70
        %p394 = pneg %p67
        %p395 = pneg %p91
        %p396 = pneg %p88
        %p397 = pneg %p112
        %p398 = pneg %p109
        %p399 = pneg %p133
        %p400 = pneg %p130
        %p401 = pneg %p154
        %p402 = pneg %p151
        %p403 = pneg %p175
        %p404 = pneg %p172
        %p405 = pneg %p196
        %p406 = pneg %p193
        %p407 = pneg %p217
        %p408 = pneg %p214
        %p409 = pneg %p243
        %p410 = pneg %p240
        %s411 = sand.u32 %s230, 1
        %s412 = scalar_lea.sflag [#allocation4], %s411
        %s413 = sand.u32 %s230, 1
        %s414 = smul.addr %s413, 8
        %s415 = scalar_lea.vmem [#allocation11], %s414
        %v416 = vld [vmem:[%s360] sm:$0xff]
        %v417 = vld [vmem:[#allocation5] sm:$0xff]
        %v418 = vld [vmem:[#allocation5 + $0x8] sm:$0xff]
        %v419 = vld [vmem:[%s2] sm:$0x1]
        %v421 = vperm.slane %v419, 0
        %vm423 = vcmask 130048
        %v425 = vsel %vm423, %v416, 0
        %427 = vmatpush.msra.mxu0 0.0
        %428 = vmatpush.msra.mxu0 0.0
        %429 = vmatpush.msra.mxu0 0.0
        %430 = vmatpush.msra.mxu0 0.0
        %431 = vmatpush.msra.mxu0 0.0
        %432 = vmatpush.msra.mxu0 0.0
        %433 = vmatpush.msra.mxu0 0.0
        %434 = vmatpush.msra.mxu0 0.0
        %435 = vmatpush.msra.mxu0 0.0
        %436 = vmatpush.msra.mxu0 0.0
        %437 = vmatpush.msra.mxu0 0.0
        %438 = vmatpush.msra.mxu0 0.0
        %439 = vmatpush.msra.mxu0 0.0
        %440 = vmatpush.msra.mxu0 0.0
        %441 = vmatpush.msra.mxu0 %v418
        %442 = vmatpush.msra.mxu0 %v417
        %443 = vmatmul.f32.gmra.mxu0 %v425
        %v444 = vpop.f32.mrf.mxu0
        %v445 = vadd.f32 %v421, %v444
        %446 = vdwg.mxu0
        %vm447 = vcmask 261120
        %v448 = vsel %vm447, %v445, 0.0
        %449 = vadd.xlane.f32.xlu0 %v448
        %v450 = vpop.xlane.xlu0 %449
        %v451 = vrcp.pop 32.0
        %v452 = vmul.f32 32.0, %v451
        %v453 = vsub.f32 1.0, %v452
        %v454 = vmul.f32 %v451, %v453
        %v455 = vadd.f32 %v451, %v454
        %vm456 = vweird.f32 %v451
        %v457 = vsel %vm456, %v451, %v455
        %v458 = vmul.f32 %v450, %v457
        %v459 = vmul.f32 %v445, %v445
        %v460 = vsel %vm447, %v459, 0.0
        %461 = vadd.xlane.f32.xlu0 %v460
        %v462 = vpop.xlane.xlu0 %461
        %v463 = vmul.f32 %v462, %v457
        %v464 = vmul.f32 %v458, %v458
        %v465 = vsub.f32 %v463, %v464
        %v466 = vmax.f32 %v465, 0.0
        %v467 = vsub.f32 %v445, %v458
        %v468 = vadd.f32 %v466, 1e-05
        %v469 = vrsqrt.pop %v468
        %v470 = vmul.f32 %v469, %v468
        %v471 = vmul.f32 %v470, %v469
        %v472 = vmul.f32 0.5, %v471
        %v473 = vsub.f32 1.5, %v472
        %v474 = vmul.f32 %v469, %v473
        %vm475 = vweird.f32 %v468
        %vm476 = vweird.f32 %v469
        %vm477 = vmor %vm475, %vm476
        %v478 = vsel %vm477, %v469, %v474
        %v479 = vmul.f32 %v467, %v478
        %v480 = vmax.f32 %v479, 0.0
        %v481 = vld [vmem:[#allocation7] sm:$0xff]
        %v482 = vld [vmem:[#allocation7 + $0x8] sm:$0xff]
        %v483 = vld [vmem:[#allocation7 + $0x10] sm:$0xff]
        %v484 = vld [vmem:[#allocation7 + $0x18] sm:$0xff]
        %v485 = vld [vmem:[%s4] sm:$0x1]
        %v487 = vperm.slane %v485, 0
        %v490 = vsel %vm447, %v480, 0
        %492 = vmatpush.msra.mxu0 0.0
        %493 = vmatpush.msra.mxu0 0.0
        %494 = vmatpush.msra.mxu0 0.0
        %495 = vmatpush.msra.mxu0 0.0
        %496 = vmatpush.msra.mxu0 0.0
        %497 = vmatpush.msra.mxu0 0.0
        %498 = vmatpush.msra.mxu0 0.0
        %499 = vmatpush.msra.mxu0 0.0
        %500 = vmatpush.msra.mxu0 0.0
        %501 = vmatpush.msra.mxu0 0.0
        %502 = vmatpush.msra.mxu0 0.0
        %503 = vmatpush.msra.mxu0 0.0
        %504 = vmatpush.msra.mxu0 %v484
        %505 = vmatpush.msra.mxu0 %v483
        %506 = vmatpush.msra.mxu0 %v482
        %507 = vmatpush.msra.mxu0 %v481
        %508 = vmatmul.f32.gmra.mxu0 %v490
        %v509 = vpop.f32.mrf.mxu0
        %v510 = vadd.f32 %v487, %v509
        %511 = vdwg.mxu0
        %v512 = vsel %vm447, %v510, 0.0
        %513 = vadd.xlane.f32.xlu0 %v512
        %v514 = vpop.xlane.xlu0 %513
        %v515 = vmul.f32 %v514, %v457
        %v516 = vmul.f32 %v510, %v510
        %v517 = vsel %vm447, %v516, 0.0
        %518 = vadd.xlane.f32.xlu0 %v517
        %v519 = vpop.xlane.xlu0 %518
        %v520 = vmul.f32 %v519, %v457
        %v521 = vmul.f32 %v515, %v515
        %v522 = vsub.f32 %v520, %v521
        %v523 = vmax.f32 %v522, 0.0
        %v524 = vsub.f32 %v510, %v515
        %v525 = vadd.f32 %v523, 1e-05
        %v526 = vrsqrt.pop %v525
        %v527 = vmul.f32 %v526, %v525
        %v528 = vmul.f32 %v527, %v526
        %v529 = vmul.f32 0.5, %v528
        %v530 = vsub.f32 1.5, %v529
        %v531 = vmul.f32 %v526, %v530
        %vm532 = vweird.f32 %v525
        %vm533 = vweird.f32 %v526
        %vm534 = vmor %vm532, %vm533
        %v535 = vsel %vm534, %v526, %v531
        %v536 = vmul.f32 %v524, %v535
        %v537 = vmax.f32 %v536, 0.0
        %v538 = vld [vmem:[#allocation8] sm:$0xff]
        %v539 = vld [vmem:[#allocation8 + $0x8] sm:$0xff]
        %v540 = vld [vmem:[#allocation8 + $0x10] sm:$0xff]
        %v541 = vld [vmem:[#allocation8 + $0x18] sm:$0xff]
        %v542 = vld [vmem:[%s6] sm:$0x1]
        %v544 = vperm.slane %v542, 0
        %v547 = vsel %vm447, %v537, 0
        %549 = vmatpush.msra.mxu0 0.0
        %550 = vmatpush.msra.mxu0 0.0
        %551 = vmatpush.msra.mxu0 0.0
        %552 = vmatpush.msra.mxu0 0.0
        %553 = vmatpush.msra.mxu0 0.0
        %554 = vmatpush.msra.mxu0 0.0
        %555 = vmatpush.msra.mxu0 0.0
        %556 = vmatpush.msra.mxu0 0.0
        %557 = vmatpush.msra.mxu0 0.0
        %558 = vmatpush.msra.mxu0 0.0
        %559 = vmatpush.msra.mxu0 0.0
        %560 = vmatpush.msra.mxu0 0.0
        %561 = vmatpush.msra.mxu0 %v541
        %562 = vmatpush.msra.mxu0 %v540
        %563 = vmatpush.msra.mxu0 %v539
        %564 = vmatpush.msra.mxu0 %v538
        %565 = vmatmul.f32.gmra.mxu0 %v547
        %v566 = vpop.f32.mrf.mxu0
        %v567 = vadd.f32 %v544, %v566
        %568 = vdwg.mxu0
        %v569 = vsel %vm447, %v567, 0.0
        %570 = vadd.xlane.f32.xlu0 %v569
        %v571 = vpop.xlane.xlu0 %570
        %v572 = vmul.f32 %v571, %v457
        %v573 = vmul.f32 %v567, %v567
        %v574 = vsel %vm447, %v573, 0.0
        %575 = vadd.xlane.f32.xlu0 %v574
        %v576 = vpop.xlane.xlu0 %575
        %v577 = vmul.f32 %v576, %v457
        %v578 = vmul.f32 %v572, %v572
        %v579 = vsub.f32 %v577, %v578
        %v580 = vmax.f32 %v579, 0.0
        %v581 = vsub.f32 %v567, %v572
        %v582 = vadd.f32 %v580, 1e-05
        %v583 = vrsqrt.pop %v582
        %v584 = vmul.f32 %v583, %v582
        %v585 = vmul.f32 %v584, %v583
        %v586 = vmul.f32 0.5, %v585
        %v587 = vsub.f32 1.5, %v586
        %v588 = vmul.f32 %v583, %v587
        %vm589 = vweird.f32 %v582
        %vm590 = vweird.f32 %v583
        %vm591 = vmor %vm589, %vm590
        %v592 = vsel %vm591, %v583, %v588
        %v593 = vmul.f32 %v581, %v592
        %v594 = vmax.f32 %v593, 0.0
        %v595 = vld [vmem:[#allocation10] sm:$0xff]
        %v596 = vld [vmem:[#allocation10 + $0x8] sm:$0xff]
        %v597 = vld [vmem:[#allocation10 + $0x10] sm:$0xff]
        %v598 = vld [vmem:[#allocation10 + $0x18] sm:$0xff]
        %v599 = vld [vmem:[%s8] sm:$0x1]
        %v601 = vperm.slane %v599, 0
        %v604 = vsel %vm447, %v594, 0
        %606 = vmatpush.msra.mxu0 0.0
        %607 = vmatpush.msra.mxu0 0.0
        %608 = vmatpush.msra.mxu0 0.0
        %609 = vmatpush.msra.mxu0 0.0
        %610 = vmatpush.msra.mxu0 0.0
        %611 = vmatpush.msra.mxu0 0.0
        %612 = vmatpush.msra.mxu0 0.0
        %613 = vmatpush.msra.mxu0 0.0
        %614 = vmatpush.msra.mxu0 0.0
        %615 = vmatpush.msra.mxu0 0.0
        %616 = vmatpush.msra.mxu0 0.0
        %617 = vmatpush.msra.mxu0 0.0
        %618 = vmatpush.msra.mxu0 %v598
        %619 = vmatpush.msra.mxu0 %v597
        %620 = vmatpush.msra.mxu0 %v596
        %621 = vmatpush.msra.mxu0 %v595
        %622 = vmatmul.f32.gmra.mxu0 %v604
        %v623 = vpop.f32.mrf.mxu0
        %v624 = vadd.f32 %v601, %v623
        %625 = vdwg.mxu0
        %v626 = vmin.f32 %v624, 20.0
        %v627 = vmul.f32 %v626, 1.442695
        %v628 = vpow.pop %v627
        %v629 = vadd.f32 %v628, 1.0
        %v630 = vlog2.pop %v629
        %v631 = vmul.f32 %v630, 0.6931472
        %v632 = vmul.f32 -0.5, %v628
        %v633 = vadd.f32 %v632, 1.0
        %v634 = vmul.f32 %v633, %v628
        %v635 = vand.u32 2147483647, %v628
        %vm636 = vcmp.lt.f32.partialorder %v635, 0.0004427343
        %v637 = vsel %vm636, %v634, %v631
        %vm638 = vcmp.gt.f32.partialorder %v624, 20.0
        %v639 = vsel %vm638, %v624, %v637
        %640 = vst [vmem:[%s415] sm:$0xff] %v639
        %s641 = sand.u32 %s230, 1
        %s642 = scalar_lea.sflag [#allocation4], %s641
        %s643 = sand.u32 %s230, 1
        %s644 = smul.addr %s643, 8
        %s645 = scalar_lea.vmem [#allocation11], %s644
        // Predicated region
        $region77: #{tpu_custom_call.1} parent=55 // pred_check
          %p646 = pneg %p240
        $region78: #{tpu_custom_call.1} parent=55 // pred_check_branch
          %648 = sbr.rel (%p646) target = $region80
        $region79: #{tpu_custom_call.1} parent=55 // pred_region
          %650 = vsyncadd %s642, 0
          %s651 = smul.addr %s28, 8
          %s652 = scalar_lea.hbm %s9, %s651
          %s654 = sshll.u32 %s645, 4
          %s655 = int_to_ptr.vmem [resolvable:$true] %s654
          %s656 = sshll.u32 %s652, 4
          %s657 = int_to_ptr.hbm [resolvable:$true] %s656
          %659 = dma.vmem_to_hbm [thread:$0]  %s655, 128, %s657, %s642
        $region80: #{tpu_custom_call.1} parent=55 // pred_fallthru
          _
      $region56: #{tpu_custom_call.1} parent=5 // pred_fallthru
        _
      %p660 = scmp.le.s32.totalorder 2, %s23
      // Predicated region
      $region81: #{tpu_custom_call.1} parent=5 // pred_check
        %p661 = pneg %p660
      $region82: #{tpu_custom_call.1} parent=5 // pred_check_branch
        %663 = sbr.rel (%p661) target = $region84
      $region83: #{tpu_custom_call.1} parent=5 // pred_region
        %s664 = ssub.s32 %s23, 2
        // Predicated region
        $region85: #{tpu_custom_call.1} parent=83 // pred_check
          %p665 = pneg %p246
        $region86: #{tpu_custom_call.1} parent=83 // pred_check_branch
          %667 = sbr.rel (%p665) target = $region88
        $region87: #{tpu_custom_call.1} parent=83 // pred_region
          %s668 = sand.u32 %s231, 1
          %s669 = scalar_lea.sflag [#allocation4], %s668
          %s670 = sand.u32 %s231, 1
          %s671 = smul.addr %s670, 8
          %s672 = scalar_lea.vmem [#allocation11], %s671
          %674 = dma.done %s669, 128
        $region88: #{tpu_custom_call.1} parent=83 // pred_fallthru
          _
      $region84: #{tpu_custom_call.1} parent=5 // pred_fallthru
        _
    $region6: #{tpu_custom_call.1} parent=1 // loop_footer
      %s27 = sadd.s32 1, %s23
    $region7: #{tpu_custom_call.1} parent=1 // loop_footer_branch
      %22 = sbr.rel target = $region3
    $region8: #{tpu_custom_call.1} parent=1 // loop_exit
      _
    %675 = vsyncpa [#allocation3], 1
    %s676 = scalar_lea.sflag [#allocation3], 1
    %677 = vsyncpa %s676, 1
    %678 = vsyncpa [#allocation6], 1
    %679 = vsyncpa [#allocation9], 1
    %680 = vsyncpa [#allocation4], 1
    %s681 = scalar_lea.sflag [#allocation4], 1
    %682 = vsyncpa %s681, 1

</llo_original>
